<compile_context>
chip_gen: v7x
topology: tpu7x:2x2x1
jax: 0.10.0
libtpu: 0.0.40
codegen_flags: <defaults>
</compile_context>

<pallas_src>
import functools

import jax
import jax.numpy as jnp
from jax.experimental import pallas as pl
from jax.experimental.pallas import tpu as pltpu


def _round_up(x: int, m: int) -> int:
    return ((x + m - 1) // m) * m


def attention_kernel(xq_ref, xf_ref, w_ref, o_ref, *,
                     n_keys, scale, d_pad, compute_dtype):
    """One q-tile of attention; K/V computed from the full (resident) x block."""
    xq = xq_ref[...].astype(compute_dtype)      # [block_q, d_in_pad]
    xf = xf_ref[...].astype(compute_dtype)      # [n_pad,   d_in_pad]
    w = w_ref[...].astype(compute_dtype)        # [d_in_pad, 3*d_pad]  (Q|K|V fused)

    # Q projection for this tile (MXU, f32 accumulation).
    q = jnp.dot(xq, w[:, :d_pad], preferred_element_type=jnp.float32)

    # Fused K+V projection: one wide MXU pass over the resident x block.
    kv = jnp.dot(xf, w[:, d_pad:3 * d_pad], preferred_element_type=jnp.float32)
    k = kv[:, :d_pad]                            # [n_pad, d_pad]
    v = kv[:, d_pad:]                            # [n_pad, d_pad]

    # scores = q @ k^T without materializing the transpose: contract last dims.
    scores = jax.lax.dot_general(
        q, k,
        dimension_numbers=(((1,), (1,)), ((), ())),
        preferred_element_type=jnp.float32,
    ) * scale                                    # [block_q, n_pad]

    # Mask out padded key columns so zero-padded rows don't perturb softmax.
    key_ids = jax.lax.broadcasted_iota(jnp.int32, scores.shape, 1)
    scores = jnp.where(key_ids < n_keys, scores, jnp.float32(-1e30))

    # Numerically stable softmax; normalize via EUP reciprocal (approx) * e.
    m = jnp.max(scores, axis=-1, keepdims=True)
    e = jnp.exp(scores - m)
    l = jnp.sum(e, axis=-1, keepdims=True)
    weights = e * pl.reciprocal(l, approx=True)  # [block_q, n_pad]

    ctx = jnp.dot(weights.astype(compute_dtype), v.astype(compute_dtype),
                  preferred_element_type=jnp.float32)
    o_ref[...] = ctx.astype(o_ref.dtype)         # lane-dense [block_q, d_pad] store


def self_attention(x, w_query, w_keys, w_values, *,
                   block_q=128, compute_dtype=jnp.float32):
    n, d_in = x.shape
    d_out = w_query.shape[1]
    # Matches torch: softmax(scores / keys.shape[-1] ** 0.5) — uses the REAL d_out.
    scale = 1.0 / float(d_out) ** 0.5

    # Lane-dense, (8,128)-aligned padded shapes (padding is semantically inert:
    # extra x columns / W rows are zero, extra key rows are masked, extra output
    # columns/rows are sliced off below).
    d_pad = _round_up(d_out, 128)
    d_in_pad = _round_up(d_in, 128)
    block_q = min(block_q, _round_up(n, 8))
    n_pad = _round_up(n, block_q)

    x_p = jnp.pad(x.astype(jnp.float32),
                  ((0, n_pad - n), (0, d_in_pad - d_in)))

    def _pad_w(w):
        return jnp.pad(w.astype(jnp.float32),
                       ((0, d_in_pad - d_in), (0, d_pad - d_out)))

    # Fuse Q|K|V into a single lane-aligned operand (one DMA, one resident block).
    w_qkv = jnp.concatenate([_pad_w(w_query), _pad_w(w_keys), _pad_w(w_values)],
                            axis=1)              # [d_in_pad, 3*d_pad]

    kernel = functools.partial(
        attention_kernel,
        n_keys=n, scale=scale, d_pad=d_pad, compute_dtype=compute_dtype)

    out_p = pl.pallas_call(
        kernel,
        out_shape=jax.ShapeDtypeStruct((n_pad, d_pad), jnp.float32),
        grid_spec=pltpu.PrefetchScalarGridSpec(
            num_scalar_prefetch=0,
            grid=(n_pad // block_q,),            # q-tile axis
            in_specs=[
                # per-tile x block (for Q)
                pl.BlockSpec((block_q, d_in_pad), lambda i: (i, 0)),
                # full x (for K/V), resident across the grid
                pl.BlockSpec((n_pad, d_in_pad), lambda i: (0, 0)),
                # fused QKV weights, resident across the grid
                pl.BlockSpec((d_in_pad, 3 * d_pad), lambda i: (0, 0)),
            ],
            out_specs=pl.BlockSpec((block_q, d_pad), lambda i: (i, 0)),
        ),
        compiler_params=pltpu.CompilerParams(
            # q tiles are independent -> megacore / v7x dual-TC sharding.
            dimension_semantics=("parallel",),
        ),
    )(x_p, x_p, w_qkv)

    return out_p[:n, :d_out].astype(x.dtype)


def reference(x, w_query, w_keys, w_values):
    keys = x @ w_keys
    querys = x @ w_query
    values = x @ w_values
    scores = querys @ keys.T
    w = jax.nn.softmax(scores / (keys.shape[-1] ** 0.5), axis=-1)
    return w @ values


if __name__ == "__main__":
    # Same input tensor as the PyTorch script (6 tokens, d_in=3), d_out=2.
    x = jnp.array(
        [[0.43, 0.15, 0.89],
         [0.55, 0.87, 0.66],
         [0.57, 0.85, 0.64],
         [0.22, 0.58, 0.33],
         [0.77, 0.25, 0.10],
         [0.05, 0.80, 0.55]],
        dtype=jnp.float32,
    )
    d_in, d_out = x.shape[1], 2

    # Deterministic parameter init (mirrors torch.rand: uniform [0, 1)).
    key = jax.random.PRNGKey(0)
    kq, kk, kv = jax.random.split(key, 3)
    w_query = jax.random.uniform(kq, (d_in, d_out), dtype=jnp.float32)
    w_keys = jax.random.uniform(kk, (d_in, d_out), dtype=jnp.float32)
    w_values = jax.random.uniform(kv, (d_in, d_out), dtype=jnp.float32)

    # For v6e / v7x at real sizes, pass compute_dtype=jnp.bfloat16 to feed the
    # MXU bf16 inputs (f32 accumulation). Default f32 matches torch numerics.
    out = self_attention(x, w_query, w_keys, w_values)
    out = jax.block_until_ready(out)

    ref = reference(x, w_query, w_keys, w_values)
    assert out.shape == (x.shape[0], d_out)
    # Slightly looser tolerance than exact f32: approx EUP reciprocal in softmax.
    assert jnp.allclose(out, ref, atol=2e-3, rtol=2e-3), (out, ref)

    print("KERNEL_OK")
</pallas_src>

<mosaic_0001>
module attributes {stable_mosaic.version = 11 : i64} {
  func.func @attention_kernel(%arg0: i32, %arg1: memref<8x128xf32, #tpu.memory_space<vmem>>, %arg2: memref<8x128xf32, #tpu.memory_space<vmem>>, %arg3: memref<128x384xf32, #tpu.memory_space<vmem>>, %arg4: memref<8x128xf32, #tpu.memory_space<vmem>>) attributes {dimension_semantics = [#tpu.dimension_semantics<parallel>], iteration_bounds = array<i64: 1>, scalar_prefetch = 0 : i64, scratch_operands = 0 : i64, tpu.core_type = #tpu.core_type<tc>, window_params = [{transform_indices = @transform_0, window_bounds = array<i64: 8, 128>}, {pipeline_mode = #tpu.pipeline_mode<synchronous>, transform_indices = @transform_1, window_bounds = array<i64: 8, 128>}, {pipeline_mode = #tpu.pipeline_mode<synchronous>, transform_indices = @transform_2, window_bounds = array<i64: 128, 384>}, {transform_indices = @transform_3, window_bounds = array<i64: 8, 128>}]} {
    %c0 = arith.constant 0 : index
    %c0_0 = arith.constant 0 : index
    %0 = vector.load %arg1[%c0, %c0_0] : memref<8x128xf32, #tpu.memory_space<vmem>>, vector<8x128xf32>
    %c0_1 = arith.constant 0 : index
    %c0_2 = arith.constant 0 : index
    %1 = vector.load %arg2[%c0_1, %c0_2] : memref<8x128xf32, #tpu.memory_space<vmem>>, vector<8x128xf32>
    %c0_3 = arith.constant 0 : index
    %c0_4 = arith.constant 0 : index
    %2 = vector.load %arg3[%c0_3, %c0_4] : memref<128x384xf32, #tpu.memory_space<vmem>>, vector<128x384xf32>
    %3 = vector.extract_strided_slice %2 {offsets = [0, 0], sizes = [128, 128], strides = [1, 1]} : vector<128x384xf32> to vector<128x128xf32>
    %cst = arith.constant dense<0.000000e+00> : vector<8x128xf32>
    %4 = tpu.matmul %0, %3, %cst {dimension_numbers = #tpu.dot_dimension_numbers<[1], [0], [0], [1], [0, 0, 1, 1], [], []>} : vector<8x128xf32>, vector<128x128xf32>, vector<8x128xf32> -> vector<8x128xf32>
    %5 = vector.extract_strided_slice %2 {offsets = [0, 128], sizes = [128, 256], strides = [1, 1]} : vector<128x384xf32> to vector<128x256xf32>
    %cst_5 = arith.constant dense<0.000000e+00> : vector<8x256xf32>
    %6 = tpu.matmul %1, %5, %cst_5 {dimension_numbers = #tpu.dot_dimension_numbers<[1], [0], [0], [1], [0, 0, 1, 1], [], []>} : vector<8x128xf32>, vector<128x256xf32>, vector<8x256xf32> -> vector<8x256xf32>
    %7 = vector.extract_strided_slice %6 {offsets = [0, 0], sizes = [8, 128], strides = [1, 1]} : vector<8x256xf32> to vector<8x128xf32>
    %8 = vector.extract_strided_slice %6 {offsets = [0, 128], sizes = [8, 128], strides = [1, 1]} : vector<8x256xf32> to vector<8x128xf32>
    %cst_6 = arith.constant dense<0.000000e+00> : vector<8x8xf32>
    %9 = tpu.matmul %4, %7, %cst_6 {dimension_numbers = #tpu.dot_dimension_numbers<[1], [1], [0], [0], [0, 0, 1, 0], [], []>} : vector<8x128xf32>, vector<8x128xf32>, vector<8x8xf32> -> vector<8x8xf32>
    %cst_7 = arith.constant 0.707106769 : f32
    %10 = vector.broadcast %cst_7 : f32 to vector<8x8xf32>
    %11 = arith.mulf %9, %10 : vector<8x8xf32>
    %12 = tpu.iota {dimensions = array<i32: 1>} : vector<8x8xi32>
    %c6_i32 = arith.constant 6 : i32
    %13 = vector.broadcast %c6_i32 : i32 to vector<8x8xi32>
    %14 = arith.cmpi slt, %12, %13 : vector<8x8xi32>
    %cst_8 = arith.constant -1.000000e+30 : f32
    %15 = vector.broadcast %cst_8 : f32 to vector<8x8xf32>
    %16 = arith.select %14, %11, %15 : vector<8x8xi1>, vector<8x8xf32>
    %cst_9 = arith.constant dense<0xFF800000> : vector<8xf32>
    %17 = vector.multi_reduction <maximumf>, %16, %cst_9 [1] : vector<8x8xf32> to vector<8xf32>
    %18 = vector.shape_cast %17 : vector<8xf32> to vector<8x1xf32>
    %19 = vector.broadcast %18 : vector<8x1xf32> to vector<8x8xf32>
    %20 = arith.subf %16, %19 : vector<8x8xf32>
    %21 = math.exp %20 : vector<8x8xf32>
    %cst_10 = arith.constant dense<0.000000e+00> : vector<8xf32>
    %22 = vector.multi_reduction <add>, %21, %cst_10 [1] : vector<8x8xf32> to vector<8xf32>
    %23 = vector.shape_cast %22 : vector<8xf32> to vector<8x1xf32>
    %24 = tpu.reciprocal %23 {approx = true} : vector<8x1xf32> -> vector<8x1xf32>
    %25 = vector.broadcast %24 : vector<8x1xf32> to vector<8x8xf32>
    %26 = arith.mulf %21, %25 : vector<8x8xf32>
    %cst_11 = arith.constant dense<0.000000e+00> : vector<8x128xf32>
    %27 = tpu.matmul %26, %8, %cst_11 {dimension_numbers = #tpu.dot_dimension_numbers<[1], [0], [0], [1], [0, 0, 1, 1], [], []>} : vector<8x8xf32>, vector<8x128xf32>, vector<8x128xf32> -> vector<8x128xf32>
    %c0_12 = arith.constant 0 : index
    %c0_13 = arith.constant 0 : index
    %28 = vector.load %arg4[%c0_12, %c0_13] : memref<8x128xf32, #tpu.memory_space<vmem>>, vector<8x128xf32>
    tpu.vector_store %arg4[%c0_12, %c0_13], %27 {strides = array<i32>} : memref<8x128xf32, #tpu.memory_space<vmem>>, vector<8x128xf32>,
    return
  }
  func.func @transform_0(%arg0: i32) -> (i32, i32) {
    %c0_i32 = arith.constant 0 : i32
    %c0_i32_0 = arith.constant 0 : i32
    return %arg0, %c0_i32 : i32, i32
  }
  func.func @transform_1(%arg0: i32) -> (i32, i32) {
    %c0_i32 = arith.constant 0 : i32
    %c0_i32_0 = arith.constant 0 : i32
    %c0_i32_1 = arith.constant 0 : i32
    return %c0_i32, %c0_i32_0 : i32, i32
  }
  func.func @transform_2(%arg0: i32) -> (i32, i32) {
    %c0_i32 = arith.constant 0 : i32
    %c0_i32_0 = arith.constant 0 : i32
    %c0_i32_1 = arith.constant 0 : i32
    return %c0_i32, %c0_i32_0 : i32, i32
  }
  func.func @transform_3(%arg0: i32) -> (i32, i32) {
    %c0_i32 = arith.constant 0 : i32
    %c0_i32_0 = arith.constant 0 : i32
    return %arg0, %c0_i32 : i32, i32
  }
}

</mosaic_0001>

<llo_original>
// kernel: tpu_custom_call.1
$region0: #{tpu_custom_call.1}
  #allocation0 [shape = 'u32[]', space=smem, size = 0x4, offset = 0x4, fixed_abs, tag = 'smem constant byte address 0x4 - core index']
  #allocation1 [shape = 'u32[144,128]{1,0:T(1,128)}', space=vmem, size = 0x12000, scoped, tag = 'internal scratch']
  %s0 = inlined_call_operand.hbm [shape: f32[8,128], index: 0, kind: input, shape index: {}]
  %s1 = inlined_call_operand.hbm [shape: f32[8,128], index: 1, kind: input, shape index: {}]
  %s2 = inlined_call_operand.hbm [shape: f32[128,384], index: 2, kind: input, shape index: {}]
  %s3 = inlined_call_operand.hbm [shape: f32[8,128], index: 3, kind: output, shape index: {}]
  %s4 = sld [smem:[#allocation0]]
  $region34: #{tpu_custom_call.1} parent=0
    _
  %s6 = ssub.s32 1, %s4
  %s7 = scalar_select 0, %s6, %s4
  $region1: #{tpu_custom_call.1} parent=0
    #allocation2 [shape = 'u8[4096]{0}', space=vmem, size = 0x1000, scoped, tag = 'input window, operand 0, single buffered']
    #allocation3 [shape = 's32[1]{0}', space=sflag, size = 0x4, scoped, tag = 'scoped memory for tpu_custom_call.1']
    #allocation4 [shape = 's32[1]{0}', space=sflag, size = 0x4, scoped, tag = 'scoped memory for tpu_custom_call.1']
    #allocation5 [shape = 'u8[4096]{0}', space=vmem, size = 0x1000, scoped, tag = 'input window, operand 1, single buffered']
    #allocation6 [shape = 's32[1]{0}', space=sflag, size = 0x4, scoped, tag = 'scoped memory for tpu_custom_call.1']
    #allocation7 [shape = 'u8[196608]{0}', space=vmem, size = 0x30000, scoped, tag = 'input window, operand 2, single buffered']
    #allocation8 [shape = 'u8[4096]{0}', space=vmem, size = 0x1000, scoped, tag = 'output window, operand 0, single buffered']
    %8 = vsyncpa [#allocation3], 0
    %9 = vsyncpa [#allocation6], 0
    %10 = vsyncpa [#allocation4], 0
    // Predicated region
    $region2: #{tpu_custom_call.1} parent=1 // pred_check
      _
    $region3: #{tpu_custom_call.1} parent=1 // pred_check_branch
      %12 = sbr.rel (0) target = $region5
    $region4: #{tpu_custom_call.1} parent=1 // pred_region
      %s14 = ssub.s32 128, 128
      %15 = vsyncadd [#allocation3], %s14
      %s17 = sshll.u32 [#allocation2], 4
      %s18 = int_to_ptr.vmem [resolvable:$true] %s17
      %20 = dma.hbm_to_vmem [thread:$0]  %s0, 128, %s18, [#allocation3]
    $region5: #{tpu_custom_call.1} parent=1 // pred_fallthru
      _
    // Predicated region
    $region6: #{tpu_custom_call.1} parent=1 // pred_check
      _
    $region7: #{tpu_custom_call.1} parent=1 // pred_check_branch
      %22 = sbr.rel (0) target = $region9
    $region8: #{tpu_custom_call.1} parent=1 // pred_region
      %s24 = ssub.s32 128, 128
      %25 = vsyncadd [#allocation6], %s24
      %s27 = sshll.u32 [#allocation5], 4
      %s28 = int_to_ptr.vmem [resolvable:$true] %s27
      %30 = dma.hbm_to_vmem [thread:$0]  %s1, 128, %s28, [#allocation6]
    $region9: #{tpu_custom_call.1} parent=1 // pred_fallthru
      _
    // Predicated region
    $region10: #{tpu_custom_call.1} parent=1 // pred_check
      _
    $region11: #{tpu_custom_call.1} parent=1 // pred_check_branch
      %32 = sbr.rel (0) target = $region13
    $region12: #{tpu_custom_call.1} parent=1 // pred_region
      %s34 = ssub.s32 6144, 6144
      %35 = vsyncadd [#allocation6], %s34
      %s36 = sshll.u32 [#allocation7], 4
      %s37 = int_to_ptr.vmem [resolvable:$true] %s36
      %42 = dma.hbm_to_vmem [thread:$0]  %s2, 6144, %s37, [#allocation6], 384, 384, 24
    $region13: #{tpu_custom_call.1} parent=1 // pred_fallthru
      _
    // Predicated region
    $region14: #{tpu_custom_call.1} parent=1 // pred_check
      _
    $region15: #{tpu_custom_call.1} parent=1 // pred_check_branch
      %44 = sbr.rel (0) target = $region17
    $region16: #{tpu_custom_call.1} parent=1 // pred_region
      %45 = dma.done [#allocation3], 128
    $region17: #{tpu_custom_call.1} parent=1 // pred_fallthru
      _
    // Predicated region
    $region18: #{tpu_custom_call.1} parent=1 // pred_check
      _
    $region19: #{tpu_custom_call.1} parent=1 // pred_check_branch
      %47 = sbr.rel (0) target = $region21
    $region20: #{tpu_custom_call.1} parent=1 // pred_region
      %48 = dma.done [#allocation6], 128
    $region21: #{tpu_custom_call.1} parent=1 // pred_fallthru
      _
    // Predicated region
    $region22: #{tpu_custom_call.1} parent=1 // pred_check
      _
    $region23: #{tpu_custom_call.1} parent=1 // pred_check_branch
      %50 = sbr.rel (0) target = $region25
    $region24: #{tpu_custom_call.1} parent=1 // pred_region
      %51 = dma.done [#allocation6], 6144
    $region25: #{tpu_custom_call.1} parent=1 // pred_fallthru
      _
    %v52 = vld [vmem:[#allocation2] sm:$0xff]
    %v53 = vld [vmem:[#allocation5] sm:$0xff]
    %v54 = vld [vmem:[#allocation7] sm:$0xff]
    %v55 = vld [vmem:[#allocation7 + $0x8] sm:$0xff]
    %v56 = vld [vmem:[#allocation7 + $0x10] sm:$0xff]
    %v57 = vld [vmem:[#allocation7 + $0x18] sm:$0xff]
    %v58 = vld [vmem:[#allocation7 + $0x20] sm:$0xff]
    %v59 = vld [vmem:[#allocation7 + $0x28] sm:$0xff]
    %v60 = vld [vmem:[#allocation7 + $0x30] sm:$0xff]
    %v61 = vld [vmem:[#allocation7 + $0x38] sm:$0xff]
    %v62 = vld [vmem:[#allocation7 + $0x40] sm:$0xff]
    %v63 = vld [vmem:[#allocation7 + $0x48] sm:$0xff]
    %v64 = vld [vmem:[#allocation7 + $0x50] sm:$0xff]
    %v65 = vld [vmem:[#allocation7 + $0x58] sm:$0xff]
    %v66 = vld [vmem:[#allocation7 + $0x60] sm:$0xff]
    %v67 = vld [vmem:[#allocation7 + $0x68] sm:$0xff]
    %v68 = vld [vmem:[#allocation7 + $0x70] sm:$0xff]
    %v69 = vld [vmem:[#allocation7 + $0x78] sm:$0xff]
    %v70 = vld [vmem:[#allocation7 + $0x80] sm:$0xff]
    %v71 = vld [vmem:[#allocation7 + $0x88] sm:$0xff]
    %v72 = vld [vmem:[#allocation7 + $0x90] sm:$0xff]
    %v73 = vld [vmem:[#allocation7 + $0x98] sm:$0xff]
    %v74 = vld [vmem:[#allocation7 + $0xa0] sm:$0xff]
    %v75 = vld [vmem:[#allocation7 + $0xa8] sm:$0xff]
    %v76 = vld [vmem:[#allocation7 + $0xb0] sm:$0xff]
    %v77 = vld [vmem:[#allocation7 + $0xb8] sm:$0xff]
    %v78 = vld [vmem:[#allocation7 + $0xc0] sm:$0xff]
    %v79 = vld [vmem:[#allocation7 + $0xc8] sm:$0xff]
    %v80 = vld [vmem:[#allocation7 + $0xd0] sm:$0xff]
    %v81 = vld [vmem:[#allocation7 + $0xd8] sm:$0xff]
    %v82 = vld [vmem:[#allocation7 + $0xe0] sm:$0xff]
    %v83 = vld [vmem:[#allocation7 + $0xe8] sm:$0xff]
    %v84 = vld [vmem:[#allocation7 + $0xf0] sm:$0xff]
    %v85 = vld [vmem:[#allocation7 + $0xf8] sm:$0xff]
    %v86 = vld [vmem:[#allocation7 + $0x100] sm:$0xff]
    %v87 = vld [vmem:[#allocation7 + $0x108] sm:$0xff]
    %v88 = vld [vmem:[#allocation7 + $0x110] sm:$0xff]
    %v89 = vld [vmem:[#allocation7 + $0x118] sm:$0xff]
    %v90 = vld [vmem:[#allocation7 + $0x120] sm:$0xff]
    %v91 = vld [vmem:[#allocation7 + $0x128] sm:$0xff]
    %v92 = vld [vmem:[#allocation7 + $0x130] sm:$0xff]
    %v93 = vld [vmem:[#allocation7 + $0x138] sm:$0xff]
    %v94 = vld [vmem:[#allocation7 + $0x140] sm:$0xff]
    %v95 = vld [vmem:[#allocation7 + $0x148] sm:$0xff]
    %v96 = vld [vmem:[#allocation7 + $0x150] sm:$0xff]
    %v97 = vld [vmem:[#allocation7 + $0x158] sm:$0xff]
    %v98 = vld [vmem:[#allocation7 + $0x160] sm:$0xff]
    %v99 = vld [vmem:[#allocation7 + $0x168] sm:$0xff]
    %v100 = vld [vmem:[#allocation7 + $0x170] sm:$0xff]
    %v101 = vld [vmem:[#allocation7 + $0x178] sm:$0xff]
    %102 = vmatprep.subr.mxu0 0.0
    %103 = vmatpush1.msra.mxu0 %v54
    %104 = vmatprep.subr.mxu0 0.0
    %105 = vmatpush1.msra.mxu0 %v57
    %106 = vmatprep.subr.mxu0 0.0
    %107 = vmatpush1.msra.mxu0 %v60
    %108 = vmatprep.subr.mxu0 0.0
    %109 = vmatpush1.msra.mxu0 %v63
    %110 = vmatprep.subr.mxu0 0.0
    %111 = vmatpush1.msra.mxu0 %v66
    %112 = vmatprep.subr.mxu0 0.0
    %113 = vmatpush1.msra.mxu0 %v69
    %114 = vmatprep.subr.mxu0 0.0
    %115 = vmatpush1.msra.mxu0 %v72
    %116 = vmatprep.subr.mxu0 0.0
    %117 = vmatpush1.msra.mxu0 %v75
    %118 = vmatprep.subr.mxu0 0.0
    %119 = vmatpush1.msra.mxu0 %v78
    %120 = vmatprep.subr.mxu0 0.0
    %121 = vmatpush1.msra.mxu0 %v81
    %122 = vmatprep.subr.mxu0 0.0
    %123 = vmatpush1.msra.mxu0 %v84
    %124 = vmatprep.subr.mxu0 0.0
    %125 = vmatpush1.msra.mxu0 %v87
    %126 = vmatprep.subr.mxu0 0.0
    %127 = vmatpush1.msra.mxu0 %v90
    %128 = vmatprep.subr.mxu0 0.0
    %129 = vmatpush1.msra.mxu0 %v93
    %130 = vmatprep.subr.mxu0 0.0
    %131 = vmatpush1.msra.mxu0 %v96
    %132 = vmatprep.subr.mxu0 0.0
    %133 = vmatpush1.msra.mxu0 %v99
    %134 = vmatprep.subr.mxu0 0.0
    %135 = vmatpush1.msra.mxu0 0.0
    %136 = vmatprep.subr.mxu0 0.0
    %137 = vmatpush1.msra.mxu0 0.0
    %138 = vmatprep.subr.mxu0 0.0
    %139 = vmatpush1.msra.mxu0 0.0
    %140 = vmatprep.subr.mxu0 0.0
    %141 = vmatpush1.msra.mxu0 0.0
    %142 = vmatprep.subr.mxu0 0.0
    %143 = vmatpush1.msra.mxu0 0.0
    %144 = vmatprep.subr.mxu0 0.0
    %145 = vmatpush1.msra.mxu0 0.0
    %146 = vmatprep.subr.mxu0 0.0
    %147 = vmatpush1.msra.mxu0 0.0
    %148 = vmatprep.subr.mxu0 0.0
    %149 = vmatpush1.msra.mxu0 0.0
    %150 = vmatprep.subr.mxu0 0.0
    %151 = vmatpush1.msra.mxu0 0.0
    %152 = vmatprep.subr.mxu0 0.0
    %153 = vmatpush1.msra.mxu0 0.0
    %154 = vmatprep.subr.mxu0 0.0
    %155 = vmatpush1.msra.mxu0 0.0
    %156 = vmatprep.subr.mxu0 0.0
    %157 = vmatpush1.msra.mxu0 0.0
    %158 = vmatprep.subr.mxu0 0.0
    %159 = vmatpush1.msra.mxu0 0.0
    %160 = vmatprep.subr.mxu0 0.0
    %161 = vmatpush1.msra.mxu0 0.0
    %162 = vmatprep.subr.mxu0 0.0
    %163 = vmatpush1.msra.mxu0 0.0
    %164 = vmatprep.subr.mxu0 0.0
    %165 = vmatpush1.msra.mxu0 0.0
    %166 = vmatprep.mubr.f32.mxu0 0.0
    %167 = vmatmul.mubr.f32.gmra.mrb[0].mxu0 %v52
    %v168 = vpop.f32.mrb[0].mxu0
    %v169 = vadd.f32 0.0, %v168
    %v170 = vpop.f32.mrb[0].mxu0
    %171 = vdwg.mxu0
    %172 = vmatprep.subr.mxu0 %v56
    %173 = vmatpush1.msra.mxu0 %v55
    %174 = vmatprep.subr.mxu0 %v59
    %175 = vmatpush1.msra.mxu0 %v58
    %176 = vmatprep.subr.mxu0 %v62
    %177 = vmatpush1.msra.mxu0 %v61
    %178 = vmatprep.subr.mxu0 %v65
    %179 = vmatpush1.msra.mxu0 %v64
    %180 = vmatprep.subr.mxu0 %v68
    %181 = vmatpush1.msra.mxu0 %v67
    %182 = vmatprep.subr.mxu0 %v71
    %183 = vmatpush1.msra.mxu0 %v70
    %184 = vmatprep.subr.mxu0 %v74
    %185 = vmatpush1.msra.mxu0 %v73
    %186 = vmatprep.subr.mxu0 %v77
    %187 = vmatpush1.msra.mxu0 %v76
    %188 = vmatprep.subr.mxu0 %v80
    %189 = vmatpush1.msra.mxu0 %v79
    %190 = vmatprep.subr.mxu0 %v83
    %191 = vmatpush1.msra.mxu0 %v82
    %192 = vmatprep.subr.mxu0 %v86
    %193 = vmatpush1.msra.mxu0 %v85
    %194 = vmatprep.subr.mxu0 %v89
    %195 = vmatpush1.msra.mxu0 %v88
    %196 = vmatprep.subr.mxu0 %v92
    %197 = vmatpush1.msra.mxu0 %v91
    %198 = vmatprep.subr.mxu0 %v95
    %199 = vmatpush1.msra.mxu0 %v94
    %200 = vmatprep.subr.mxu0 %v98
    %201 = vmatpush1.msra.mxu0 %v97
    %202 = vmatprep.subr.mxu0 %v101
    %203 = vmatpush1.msra.mxu0 %v100
    %204 = vmatprep.subr.mxu0 0.0
    %205 = vmatpush1.msra.mxu0 0.0
    %206 = vmatprep.subr.mxu0 0.0
    %207 = vmatpush1.msra.mxu0 0.0
    %208 = vmatprep.subr.mxu0 0.0
    %209 = vmatpush1.msra.mxu0 0.0
    %210 = vmatprep.subr.mxu0 0.0
    %211 = vmatpush1.msra.mxu0 0.0
    %212 = vmatprep.subr.mxu0 0.0
    %213 = vmatpush1.msra.mxu0 0.0
    %214 = vmatprep.subr.mxu0 0.0
    %215 = vmatpush1.msra.mxu0 0.0
    %216 = vmatprep.subr.mxu0 0.0
    %217 = vmatpush1.msra.mxu0 0.0
    %218 = vmatprep.subr.mxu0 0.0
    %219 = vmatpush1.msra.mxu0 0.0
    %220 = vmatprep.subr.mxu0 0.0
    %221 = vmatpush1.msra.mxu0 0.0
    %222 = vmatprep.subr.mxu0 0.0
    %223 = vmatpush1.msra.mxu0 0.0
    %224 = vmatprep.subr.mxu0 0.0
    %225 = vmatpush1.msra.mxu0 0.0
    %226 = vmatprep.subr.mxu0 0.0
    %227 = vmatpush1.msra.mxu0 0.0
    %228 = vmatprep.subr.mxu0 0.0
    %229 = vmatpush1.msra.mxu0 0.0
    %230 = vmatprep.subr.mxu0 0.0
    %231 = vmatpush1.msra.mxu0 0.0
    %232 = vmatprep.subr.mxu0 0.0
    %233 = vmatpush1.msra.mxu0 0.0
    %234 = vmatprep.subr.mxu0 0.0
    %235 = vmatpush1.msra.mxu0 0.0
    %236 = vmatprep.mubr.f32.mxu0 0.0
    %237 = vmatmul.mubr.f32.gmra.mrb[0].mxu0 %v53
    %v238 = vpop.f32.mrb[0].mxu0
    %v239 = vadd.f32 0.0, %v238
    %v240 = vpop.f32.mrb[0].mxu0
    %v241 = vadd.f32 0.0, %v240
    %242 = vdwg.mxu0
    %243 = vmatprep.subr.mxu0 0.0
    %244 = vmatpush1.xpose.msra.mxu0 %v239
    %245 = vmatprep.subr.mxu0 0.0
    %246 = vmatpush1.xpose.msra.mxu0 0.0
    %247 = vmatprep.subr.mxu0 0.0
    %248 = vmatpush1.xpose.msra.mxu0 0.0
    %249 = vmatprep.subr.mxu0 0.0
    %250 = vmatpush1.xpose.msra.mxu0 0.0
    %251 = vmatprep.subr.mxu0 0.0
    %252 = vmatpush1.xpose.msra.mxu0 0.0
    %253 = vmatprep.subr.mxu0 0.0
    %254 = vmatpush1.xpose.msra.mxu0 0.0
    %255 = vmatprep.subr.mxu0 0.0
    %256 = vmatpush1.xpose.msra.mxu0 0.0
    %257 = vmatprep.subr.mxu0 0.0
    %258 = vmatpush1.xpose.msra.mxu0 0.0
    %259 = vmatprep.subr.mxu0 0.0
    %260 = vmatpush1.xpose.msra.mxu0 0.0
    %261 = vmatprep.subr.mxu0 0.0
    %262 = vmatpush1.xpose.msra.mxu0 0.0
    %263 = vmatprep.subr.mxu0 0.0
    %264 = vmatpush1.xpose.msra.mxu0 0.0
    %265 = vmatprep.subr.mxu0 0.0
    %266 = vmatpush1.xpose.msra.mxu0 0.0
    %267 = vmatprep.subr.mxu0 0.0
    %268 = vmatpush1.xpose.msra.mxu0 0.0
    %269 = vmatprep.subr.mxu0 0.0
    %270 = vmatpush1.xpose.msra.mxu0 0.0
    %271 = vmatprep.subr.mxu0 0.0
    %272 = vmatpush1.xpose.msra.mxu0 0.0
    %273 = vmatprep.subr.mxu0 0.0
    %274 = vmatpush1.xpose.msra.mxu0 0.0
    %275 = vmatprep.subr.mxu0 0.0
    %276 = vmatpush1.xpose.msra.mxu0 0.0
    %277 = vmatprep.subr.mxu0 0.0
    %278 = vmatpush1.xpose.msra.mxu0 0.0
    %279 = vmatprep.subr.mxu0 0.0
    %280 = vmatpush1.xpose.msra.mxu0 0.0
    %281 = vmatprep.subr.mxu0 0.0
    %282 = vmatpush1.xpose.msra.mxu0 0.0
    %283 = vmatprep.subr.mxu0 0.0
    %284 = vmatpush1.xpose.msra.mxu0 0.0
    %285 = vmatprep.subr.mxu0 0.0
    %286 = vmatpush1.xpose.msra.mxu0 0.0
    %287 = vmatprep.subr.mxu0 0.0
    %288 = vmatpush1.xpose.msra.mxu0 0.0
    %289 = vmatprep.subr.mxu0 0.0
    %290 = vmatpush1.xpose.msra.mxu0 0.0
    %291 = vmatprep.subr.mxu0 0.0
    %292 = vmatpush1.xpose.msra.mxu0 0.0
    %293 = vmatprep.subr.mxu0 0.0
    %294 = vmatpush1.xpose.msra.mxu0 0.0
    %295 = vmatprep.subr.mxu0 0.0
    %296 = vmatpush1.xpose.msra.mxu0 0.0
    %297 = vmatprep.subr.mxu0 0.0
    %298 = vmatpush1.xpose.msra.mxu0 0.0
    %299 = vmatprep.subr.mxu0 0.0
    %300 = vmatpush1.xpose.msra.mxu0 0.0
    %301 = vmatprep.subr.mxu0 0.0
    %302 = vmatpush1.xpose.msra.mxu0 0.0
    %303 = vmatprep.subr.mxu0 0.0
    %304 = vmatpush1.xpose.msra.mxu0 0.0
    %305 = vmatprep.subr.mxu0 0.0
    %306 = vmatpush1.xpose.msra.mxu0 0.0
    %307 = vmatprep.mubr.f32.mxu0 0.0
    %308 = vmatmul.mubr.f32.gmra.mrb[0].mxu0 %v169
    %v309 = vpop.f32.mrb[0].mxu0
    %v310 = vadd.f32 0.0, %v309
    %v311 = vpop.f32.mrb[0].mxu0
    %312 = vdwg.mxu0
    %v313 = vmul.f32 %v310, 0.70710677
    %v314 = vlaneseq
    %v315 = vand.u32 %v314, 127
    %vm316 = vcmp.lt.s32.totalorder %v315, 6
    %v317 = vsel %vm316, %v313, -1e+30
    %vm318 = vcmask 64512
    %v319 = vsel %vm318, %v317, -inf
    %320 = vmax.xlane.f32.xlu0 %v319
    %v321 = vpop.xlane.xlu0 %320
    %v322 = vsub.f32 %v317, %v321
    %v323 = vmul.f32 %v322, 1.442695
    %v324 = vpow.pop %v323
    %v325 = vsel %vm318, %v324, 0.0
    %326 = vadd.xlane.f32.xlu0 %v325
    %v327 = vpop.xlane.xlu0 %326
    %v328 = vrcp.pop %v327
    %v329 = vmul.f32 %v324, %v328
    %v331 = vsel %vm318, %v329, 0
    %333 = vmatprep.subr.mxu0 0.0
    %334 = vmatpush1.msra.mxu0 %v241
    %335 = vmatprep.subr.mxu0 0.0
    %336 = vmatpush1.msra.mxu0 0.0
    %337 = vmatprep.subr.mxu0 0.0
    %338 = vmatpush1.msra.mxu0 0.0
    %339 = vmatprep.subr.mxu0 0.0
    %340 = vmatpush1.msra.mxu0 0.0
    %341 = vmatprep.subr.mxu0 0.0
    %342 = vmatpush1.msra.mxu0 0.0
    %343 = vmatprep.subr.mxu0 0.0
    %344 = vmatpush1.msra.mxu0 0.0
    %345 = vmatprep.subr.mxu0 0.0
    %346 = vmatpush1.msra.mxu0 0.0
    %347 = vmatprep.subr.mxu0 0.0
    %348 = vmatpush1.msra.mxu0 0.0
    %349 = vmatprep.subr.mxu0 0.0
    %350 = vmatpush1.msra.mxu0 0.0
    %351 = vmatprep.subr.mxu0 0.0
    %352 = vmatpush1.msra.mxu0 0.0
    %353 = vmatprep.subr.mxu0 0.0
    %354 = vmatpush1.msra.mxu0 0.0
    %355 = vmatprep.subr.mxu0 0.0
    %356 = vmatpush1.msra.mxu0 0.0
    %357 = vmatprep.subr.mxu0 0.0
    %358 = vmatpush1.msra.mxu0 0.0
    %359 = vmatprep.subr.mxu0 0.0
    %360 = vmatpush1.msra.mxu0 0.0
    %361 = vmatprep.subr.mxu0 0.0
    %362 = vmatpush1.msra.mxu0 0.0
    %363 = vmatprep.subr.mxu0 0.0
    %364 = vmatpush1.msra.mxu0 0.0
    %365 = vmatprep.subr.mxu0 0.0
    %366 = vmatpush1.msra.mxu0 0.0
    %367 = vmatprep.subr.mxu0 0.0
    %368 = vmatpush1.msra.mxu0 0.0
    %369 = vmatprep.subr.mxu0 0.0
    %370 = vmatpush1.msra.mxu0 0.0
    %371 = vmatprep.subr.mxu0 0.0
    %372 = vmatpush1.msra.mxu0 0.0
    %373 = vmatprep.subr.mxu0 0.0
    %374 = vmatpush1.msra.mxu0 0.0
    %375 = vmatprep.subr.mxu0 0.0
    %376 = vmatpush1.msra.mxu0 0.0
    %377 = vmatprep.subr.mxu0 0.0
    %378 = vmatpush1.msra.mxu0 0.0
    %379 = vmatprep.subr.mxu0 0.0
    %380 = vmatpush1.msra.mxu0 0.0
    %381 = vmatprep.subr.mxu0 0.0
    %382 = vmatpush1.msra.mxu0 0.0
    %383 = vmatprep.subr.mxu0 0.0
    %384 = vmatpush1.msra.mxu0 0.0
    %385 = vmatprep.subr.mxu0 0.0
    %386 = vmatpush1.msra.mxu0 0.0
    %387 = vmatprep.subr.mxu0 0.0
    %388 = vmatpush1.msra.mxu0 0.0
    %389 = vmatprep.subr.mxu0 0.0
    %390 = vmatpush1.msra.mxu0 0.0
    %391 = vmatprep.subr.mxu0 0.0
    %392 = vmatpush1.msra.mxu0 0.0
    %393 = vmatprep.subr.mxu0 0.0
    %394 = vmatpush1.msra.mxu0 0.0
    %395 = vmatprep.subr.mxu0 0.0
    %396 = vmatpush1.msra.mxu0 0.0
    %397 = vmatprep.mubr.f32.mxu0 0.0
    %398 = vmatmul.mubr.f32.gmra.mrb[0].mxu0 %v331
    %v399 = vpop.f32.mrb[0].mxu0
    %v400 = vadd.f32 0.0, %v399
    %v401 = vpop.f32.mrb[0].mxu0
    %402 = vdwg.mxu0
    %403 = vst [vmem:[#allocation8] sm:$0xff] %v400
    // Predicated region
    $region26: #{tpu_custom_call.1} parent=1 // pred_check
      _
    $region27: #{tpu_custom_call.1} parent=1 // pred_check_branch
      %405 = sbr.rel (0) target = $region29
    $region28: #{tpu_custom_call.1} parent=1 // pred_region
      %s407 = ssub.s32 128, 128
      %408 = vsyncadd [#allocation4], %s407
      %s410 = sshll.u32 [#allocation8], 4
      %s411 = int_to_ptr.vmem [resolvable:$true] %s410
      %413 = dma.vmem_to_hbm [thread:$0]  %s411, 128, %s3, [#allocation4]
    $region29: #{tpu_custom_call.1} parent=1 // pred_fallthru
      _
    // Predicated region
    $region30: #{tpu_custom_call.1} parent=1 // pred_check
      _
    $region31: #{tpu_custom_call.1} parent=1 // pred_check_branch
      %415 = sbr.rel (0) target = $region33
    $region32: #{tpu_custom_call.1} parent=1 // pred_region
      %416 = dma.done [#allocation4], 128
    $region33: #{tpu_custom_call.1} parent=1 // pred_fallthru
      _
    %417 = vsyncpa [#allocation3], 1
    %418 = vsyncpa [#allocation6], 1
    %419 = vsyncpa [#allocation4], 1

</llo_original>
